<compile_context>
chip_gen: v5e
topology: v5e:2x2
jax: 0.10.0
libtpu: 0.0.40
codegen_flags: <defaults>
</compile_context>

<pallas_src>
import functools

import jax
import jax.numpy as jnp
from jax import lax
from jax.experimental import pallas as pl
from jax.experimental.pallas import tpu as pltpu


def _mha_kernel(x_ref, wqkv_ref, bqkv_ref, wot_ref, bo_ref, o_ref,
                q_sc, k_sc, v_sc, *, n_heads, scaling, tq):
    # Block shapes:
    #   x_ref  : (1, N, D)   full sequence for this batch row
    #   wqkv   : (D, 3D)     pre-transposed fused QKV weight
    #   bqkv   : (1, 3D)
    #   wot    : (D, D)      pre-transposed output-projection weight
    #   bo     : (1, D)
    #   o_ref  : (1, tq, D)  query-row tile of the output
    #   q/k/v_sc : (N, D)    per-batch cached projections (V pre-scaled)
    N = x_ref.shape[1]
    D = x_ref.shape[2]
    hd = D // n_heads
    qi = pl.program_id(1)

    # ---- Fused QKV projection: computed ONCE per batch row, cached across q-tiles.
    @pl.when(qi == 0)
    def _():
        xb = x_ref[0]                                          # (N, D)
        qkv = jnp.dot(xb, wqkv_ref[...],
                      preferred_element_type=jnp.float32) + bqkv_ref[...]
        q_sc[...] = qkv[:, :D].astype(q_sc.dtype)
        k_sc[...] = qkv[:, D:2 * D].astype(k_sc.dtype)
        # Fold post-softmax scaling into V: (softmax(E) * s) @ V == softmax(E) @ (s * V)
        v_sc[...] = (qkv[:, 2 * D:] * scaling).astype(v_sc.dtype)

    q_start = pl.multiple_of(qi * tq, tq)
    q_tile = q_sc[pl.ds(q_start, tq), :]                       # (tq, D)
    k_all = k_sc[...]                                          # (N, D)
    v_all = v_sc[...]                                          # (N, D), pre-scaled

    # Output accumulator (f32), initialized with the output-projection bias.
    y = jnp.broadcast_to(bo_ref[...], (tq, D)).astype(jnp.float32)

    # Per-head attention + per-head accumulation of the output projection.
    # n_heads is small/static -> unroll in Python.
    for h in range(n_heads):
        sl = slice(h * hd, (h + 1) * hd)
        qh = q_tile[:, sl]                                     # (tq, hd)
        kh = k_all[:, sl]                                      # (N,  hd)
        vh = v_all[:, sl]                                      # (N,  hd)

        # energy = q @ k^T without an explicit transpose of K (contract last dims).
        energy = lax.dot_general(qh, kh, (((1,), (1,)), ((), ())),
                                 preferred_element_type=jnp.float32)  # (tq, N)

        # softmax over keys (f32 on the VPU; reciprocal on the EUP).
        m = jnp.max(energy, axis=-1, keepdims=True)
        e = jnp.exp(energy - m)
        inv = pl.reciprocal(jnp.sum(e, axis=-1, keepdims=True), approx=True)
        att = (e * inv).astype(vh.dtype)

        out_h = jnp.dot(att, vh, preferred_element_type=jnp.float32)  # (tq, hd)

        # Accumulate the output projection for this head: no head-concat relayout.
        y = y + jnp.dot(out_h.astype(wot_ref.dtype), wot_ref[sl, :],
                        preferred_element_type=jnp.float32)           # (tq, D)

    o_ref[0] = y.astype(o_ref.dtype)


def multi_head_attention(x, params, *, n_heads, tq=None, compute_dtype=None):
    """x: (B, N, D).  params: PyTorch-Linear-layout weights/biases.

    compute_dtype: dtype fed to the MXU (e.g. jnp.bfloat16 on v5e/v6e/v7x);
    softmax / bias adds / accumulation stay float32.  Defaults to x.dtype.
    """
    B, N, D = x.shape
    assert D % n_heads == 0, "hidden_d must be divisible by n_heads"
    scaling = float((D // n_heads) ** (-0.5))

    # Query-row tile.  For production ViT shapes pick e.g. 128/256; must divide N.
    if tq is None:
        tq = N if N <= 256 else 256
    assert N % tq == 0, "tq must divide N"
    nq = N // tq

    cdt = jnp.dtype(compute_dtype) if compute_dtype is not None else x.dtype

    # ---- Wrapper-side (one-time) weight plumbing: fuse + pre-transpose, no in-kernel .T.
    # Fused QKV weight: x @ wqkv -> [q | k | v]  (columns [0:D]=Q, [D:2D]=K, [2D:3D]=V).
    wqkv = jnp.concatenate([params["wq"], params["wk"], params["wv"]], axis=0).T
    wqkv = wqkv.astype(cdt)                                            # (D, 3D)
    bqkv = jnp.concatenate([params["bq"], params["bk"], params["bv"]])
    bqkv = bqkv.reshape(1, 3 * D).astype(jnp.float32)                  # (1, 3D)
    wo_t = params["wo"].T.astype(cdt)                                  # (D, D)
    bo = params["bo"].reshape(1, D).astype(jnp.float32)                # (1, D)
    xc = x.astype(cdt)

    kernel = functools.partial(_mha_kernel, n_heads=n_heads, scaling=scaling, tq=tq)

    # Constant operands: single-buffered (they never change across the grid).
    const1 = dict(pipeline_mode=pl.Buffered(1))
    wqkv_spec = pl.BlockSpec((D, 3 * D), lambda b, q: (0, 0), **const1)
    bqkv_spec = pl.BlockSpec((1, 3 * D), lambda b, q: (0, 0), **const1)
    wo_spec = pl.BlockSpec((D, D), lambda b, q: (0, 0), **const1)
    bo_spec = pl.BlockSpec((1, D), lambda b, q: (0, 0), **const1)
    x_spec = pl.BlockSpec((1, N, D), lambda b, q: (b, 0, 0))
    out_spec = pl.BlockSpec((1, tq, D), lambda b, q: (b, q, 0))

    itemsize = jnp.dtype(cdt).itemsize
    cost = pl.CostEstimate(
        flops=int(B * (2 * N * D * 3 * D + 4 * N * N * D + 2 * N * D * D)),
        transcendentals=int(B * n_heads * N * N),
        bytes_accessed=int(itemsize * (2 * B * N * D + 3 * D * D + D * D)
                           + 4 * (3 * D + D)),
    )

    return pl.pallas_call(
        kernel,
        out_shape=jax.ShapeDtypeStruct((B, N, D), x.dtype),
        grid_spec=pltpu.PrefetchScalarGridSpec(
            num_scalar_prefetch=0,
            grid=(B, nq),
            in_specs=[x_spec, wqkv_spec, bqkv_spec, wo_spec, bo_spec],
            out_specs=out_spec,
            scratch_shapes=[
                pltpu.VMEM((N, D), cdt),   # Q cache
                pltpu.VMEM((N, D), cdt),   # K cache
                pltpu.VMEM((N, D), cdt),   # V cache (pre-scaled)
            ],
        ),
        compiler_params=pltpu.CompilerParams(
            dimension_semantics=("parallel", "arbitrary"),
            vmem_limit_bytes=32 * 1024 * 1024,
        ),
        cost_estimate=cost,
    )(xc, wqkv, bqkv, wo_t, bo)


def _reference(x, params, n_heads):
    """Plain-JAX reference mirroring the PyTorch forward exactly."""
    B, N, D = x.shape
    hd = D // n_heads
    scaling = (D // n_heads) ** (-0.5)

    def lin(t, w, b):
        return t @ w.T + b

    q = lin(x, params["wq"], params["bq"]).reshape(B, N, n_heads, hd).transpose(0, 2, 1, 3)
    k = lin(x, params["wk"], params["bk"]).reshape(B, N, n_heads, hd).transpose(0, 2, 1, 3)
    v = lin(x, params["wv"], params["bv"]).reshape(B, N, n_heads, hd).transpose(0, 2, 1, 3)
    energy = jnp.einsum("bhqd,bhkd->bhqk", q, k)
    att = jax.nn.softmax(energy, axis=-1) * scaling
    out = jnp.einsum("bhal,bhlv->bhav", att, v)
    out = out.transpose(0, 2, 1, 3).reshape(B, N, D)
    return lin(out, params["wo"], params["bo"])


if __name__ == "__main__":
    # Small shapes consistent with the module: hidden_d divisible by n_heads.
    B, N, D, H = 2, 8, 32, 4

    key = jax.random.PRNGKey(0)
    ks = jax.random.split(key, 9)
    scale = 0.05
    params = {
        "wq": scale * jax.random.normal(ks[0], (D, D), jnp.float32),
        "bq": scale * jax.random.normal(ks[1], (D,), jnp.float32),
        "wk": scale * jax.random.normal(ks[2], (D, D), jnp.float32),
        "bk": scale * jax.random.normal(ks[3], (D,), jnp.float32),
        "wv": scale * jax.random.normal(ks[4], (D, D), jnp.float32),
        "bv": scale * jax.random.normal(ks[5], (D,), jnp.float32),
        "wo": scale * jax.random.normal(ks[6], (D, D), jnp.float32),
        "bo": scale * jax.random.normal(ks[7], (D,), jnp.float32),
    }
    x = jax.random.normal(ks[8], (B, N, D), jnp.float32)

    out = multi_head_attention(x, params, n_heads=H)
    out = jax.block_until_ready(out)

    ref = _reference(x, params, H)
    assert out.shape == (B, N, D)
    # Slightly loosened tolerance: approx (EUP) reciprocal in the softmax denominator
    # introduces ~1e-4-level relative error vs the exact reference.
    assert jnp.allclose(out, ref, atol=1e-3, rtol=1e-3), "mismatch vs reference"

    print("KERNEL_OK")
</pallas_src>

<mosaic_0001>
module attributes {stable_mosaic.version = 11 : i64} {
  func.func @_mha_kernel(%arg0: i32, %arg1: i32, %arg2: memref<1x8x32xf32, #tpu.memory_space<vmem>>, %arg3: memref<32x96xf32, #tpu.memory_space<vmem>>, %arg4: memref<1x96xf32, #tpu.memory_space<vmem>>, %arg5: memref<32x32xf32, #tpu.memory_space<vmem>>, %arg6: memref<1x32xf32, #tpu.memory_space<vmem>>, %arg7: memref<1x8x32xf32, #tpu.memory_space<vmem>>, %arg8: memref<8x32xf32, #tpu.memory_space<vmem>>, %arg9: memref<8x32xf32, #tpu.memory_space<vmem>>, %arg10: memref<8x32xf32, #tpu.memory_space<vmem>>) attributes {dimension_semantics = [#tpu.dimension_semantics<parallel>, #tpu.dimension_semantics<arbitrary>], iteration_bounds = array<i64: 2, 1>, scalar_prefetch = 0 : i64, scratch_operands = 3 : i64, tpu.core_type = #tpu.core_type<tc>, window_params = [{transform_indices = @transform_0, window_bounds = array<i64: 1, 8, 32>}, {pipeline_mode = #tpu.pipeline_mode<synchronous>, transform_indices = @transform_1, window_bounds = array<i64: 32, 96>}, {pipeline_mode = #tpu.pipeline_mode<synchronous>, transform_indices = @transform_2, window_bounds = array<i64: 1, 96>}, {pipeline_mode = #tpu.pipeline_mode<synchronous>, transform_indices = @transform_3, window_bounds = array<i64: 32, 32>}, {pipeline_mode = #tpu.pipeline_mode<synchronous>, transform_indices = @transform_4, window_bounds = array<i64: 1, 32>}, {transform_indices = @transform_5, window_bounds = array<i64: 1, 8, 32>}]} {
    %c0_i32 = arith.constant 0 : i32
    %0 = arith.cmpi eq, %arg1, %c0_i32 : i32
    %1 = arith.extui %0 : i1 to i32
    %c0_i32_0 = arith.constant 0 : i32
    %2 = arith.cmpi ne, %1, %c0_i32_0 : i32
    scf.if %2 {
      %c0_34 = arith.constant 0 : index
      %c0_35 = arith.constant 0 : index
      %c0_36 = arith.constant 0 : index
      %87 = vector.load %arg2[%c0_34, %c0_35, %c0_36] : memref<1x8x32xf32, #tpu.memory_space<vmem>>, vector<1x8x32xf32>
      %88 = vector.shape_cast %87 : vector<1x8x32xf32> to vector<8x32xf32>
      %c0_37 = arith.constant 0 : index
      %c0_38 = arith.constant 0 : index
      %89 = vector.load %arg3[%c0_37, %c0_38] : memref<32x96xf32, #tpu.memory_space<vmem>>, vector<32x96xf32>
      %cst_39 = arith.constant dense<0.000000e+00> : vector<8x96xf32>
      %90 = tpu.matmul %88, %89, %cst_39 {dimension_numbers = #tpu.dot_dimension_numbers<[1], [0], [0], [1], [0, 0, 1, 1], [], []>} : vector<8x32xf32>, vector<32x96xf32>, vector<8x96xf32> -> vector<8x96xf32>
      %c0_40 = arith.constant 0 : index
      %c0_41 = arith.constant 0 : index
      %91 = vector.load %arg4[%c0_40, %c0_41] : memref<1x96xf32, #tpu.memory_space<vmem>>, vector<1x96xf32>
      %92 = vector.broadcast %91 : vector<1x96xf32> to vector<8x96xf32>
      %93 = arith.addf %90, %92 : vector<8x96xf32>
      %94 = vector.extract_strided_slice %93 {offsets = [0, 0], sizes = [8, 32], strides = [1, 1]} : vector<8x96xf32> to vector<8x32xf32>
      %c0_42 = arith.constant 0 : index
      %c0_43 = arith.constant 0 : index
      %95 = vector.load %arg8[%c0_42, %c0_43] : memref<8x32xf32, #tpu.memory_space<vmem>>, vector<8x32xf32>
      tpu.vector_store %arg8[%c0_42, %c0_43], %94 {strides = array<i32>} : memref<8x32xf32, #tpu.memory_space<vmem>>, vector<8x32xf32>,
      %96 = vector.extract_strided_slice %93 {offsets = [0, 32], sizes = [8, 32], strides = [1, 1]} : vector<8x96xf32> to vector<8x32xf32>
      %c0_44 = arith.constant 0 : index
      %c0_45 = arith.constant 0 : index
      %97 = vector.load %arg9[%c0_44, %c0_45] : memref<8x32xf32, #tpu.memory_space<vmem>>, vector<8x32xf32>
      tpu.vector_store %arg9[%c0_44, %c0_45], %96 {strides = array<i32>} : memref<8x32xf32, #tpu.memory_space<vmem>>, vector<8x32xf32>,
      %98 = vector.extract_strided_slice %93 {offsets = [0, 64], sizes = [8, 32], strides = [1, 1]} : vector<8x96xf32> to vector<8x32xf32>
      %cst_46 = arith.constant 0.353553385 : f32
      %99 = vector.broadcast %cst_46 : f32 to vector<8x32xf32>
      %100 = arith.mulf %98, %99 : vector<8x32xf32>
      %c0_47 = arith.constant 0 : index
      %c0_48 = arith.constant 0 : index
      %101 = vector.load %arg10[%c0_47, %c0_48] : memref<8x32xf32, #tpu.memory_space<vmem>>, vector<8x32xf32>
      tpu.vector_store %arg10[%c0_47, %c0_48], %100 {strides = array<i32>} : memref<8x32xf32, #tpu.memory_space<vmem>>, vector<8x32xf32>,
    } else {
    }
    %c8_i32 = arith.constant 8 : i32
    %3 = arith.muli %arg1, %c8_i32 : i32
    %4 = tpu.assume_multiple %3, 8 : i32
    %5 = arith.index_cast %4 : i32 to index
    %c0 = arith.constant 0 : index
    %6 = vector.load %arg8[%5, %c0] : memref<8x32xf32, #tpu.memory_space<vmem>>, vector<8x32xf32>
    %c0_1 = arith.constant 0 : index
    %c0_2 = arith.constant 0 : index
    %7 = vector.load %arg9[%c0_1, %c0_2] : memref<8x32xf32, #tpu.memory_space<vmem>>, vector<8x32xf32>
    %c0_3 = arith.constant 0 : index
    %c0_4 = arith.constant 0 : index
    %8 = vector.load %arg10[%c0_3, %c0_4] : memref<8x32xf32, #tpu.memory_space<vmem>>, vector<8x32xf32>
    %c0_5 = arith.constant 0 : index
    %c0_6 = arith.constant 0 : index
    %9 = vector.load %arg6[%c0_5, %c0_6] : memref<1x32xf32, #tpu.memory_space<vmem>>, vector<1x32xf32>
    %10 = vector.shape_cast %9 : vector<1x32xf32> to vector<1x32xf32>
    %11 = vector.broadcast %10 : vector<1x32xf32> to vector<8x32xf32>
    %12 = vector.extract_strided_slice %6 {offsets = [0, 0], sizes = [8, 8], strides = [1, 1]} : vector<8x32xf32> to vector<8x8xf32>
    %13 = vector.extract_strided_slice %7 {offsets = [0, 0], sizes = [8, 8], strides = [1, 1]} : vector<8x32xf32> to vector<8x8xf32>
    %14 = vector.extract_strided_slice %8 {offsets = [0, 0], sizes = [8, 8], strides = [1, 1]} : vector<8x32xf32> to vector<8x8xf32>
    %cst = arith.constant dense<0.000000e+00> : vector<8x8xf32>
    %15 = tpu.matmul %12, %13, %cst {dimension_numbers = #tpu.dot_dimension_numbers<[1], [1], [0], [0], [0, 0, 1, 0], [], []>} : vector<8x8xf32>, vector<8x8xf32>, vector<8x8xf32> -> vector<8x8xf32>
    %cst_7 = arith.constant dense<0xFF800000> : vector<8xf32>
    %16 = vector.multi_reduction <maximumf>, %15, %cst_7 [1] : vector<8x8xf32> to vector<8xf32>
    %17 = vector.shape_cast %16 : vector<8xf32> to vector<8x1xf32>
    %18 = vector.broadcast %17 : vector<8x1xf32> to vector<8x8xf32>
    %19 = arith.subf %15, %18 : vector<8x8xf32>
    %20 = math.exp %19 : vector<8x8xf32>
    %cst_8 = arith.constant dense<0.000000e+00> : vector<8xf32>
    %21 = vector.multi_reduction <add>, %20, %cst_8 [1] : vector<8x8xf32> to vector<8xf32>
    %22 = vector.shape_cast %21 : vector<8xf32> to vector<8x1xf32>
    %23 = tpu.reciprocal %22 {approx = true} : vector<8x1xf32> -> vector<8x1xf32>
    %24 = vector.broadcast %23 : vector<8x1xf32> to vector<8x8xf32>
    %25 = arith.mulf %20, %24 : vector<8x8xf32>
    %cst_9 = arith.constant dense<0.000000e+00> : vector<8x8xf32>
    %26 = tpu.matmul %25, %14, %cst_9 {dimension_numbers = #tpu.dot_dimension_numbers<[1], [0], [0], [1], [0, 0, 1, 1], [], []>} : vector<8x8xf32>, vector<8x8xf32>, vector<8x8xf32> -> vector<8x8xf32>
    %c0_10 = arith.constant 0 : index
    %c0_11 = arith.constant 0 : index
    %27 = vector.load %arg5[%c0_10, %c0_11] : memref<32x32xf32, #tpu.memory_space<vmem>>, vector<8x32xf32>
    %cst_12 = arith.constant dense<0.000000e+00> : vector<8x32xf32>
    %28 = tpu.matmul %26, %27, %cst_12 {dimension_numbers = #tpu.dot_dimension_numbers<[1], [0], [0], [1], [0, 0, 1, 1], [], []>} : vector<8x8xf32>, vector<8x32xf32>, vector<8x32xf32> -> vector<8x32xf32>
    %29 = arith.addf %11, %28 : vector<8x32xf32>
    %30 = vector.extract_strided_slice %6 {offsets = [0, 8], sizes = [8, 8], strides = [1, 1]} : vector<8x32xf32> to vector<8x8xf32>
    %31 = vector.extract_strided_slice %7 {offsets = [0, 8], sizes = [8, 8], strides = [1, 1]} : vector<8x32xf32> to vector<8x8xf32>
    %32 = vector.extract_strided_slice %8 {offsets = [0, 8], sizes = [8, 8], strides = [1, 1]} : vector<8x32xf32> to vector<8x8xf32>
    %cst_13 = arith.constant dense<0.000000e+00> : vector<8x8xf32>
    %33 = tpu.matmul %30, %31, %cst_13 {dimension_numbers = #tpu.dot_dimension_numbers<[1], [1], [0], [0], [0, 0, 1, 0], [], []>} : vector<8x8xf32>, vector<8x8xf32>, vector<8x8xf32> -> vector<8x8xf32>
    %cst_14 = arith.constant dense<0xFF800000> : vector<8xf32>
    %34 = vector.multi_reduction <maximumf>, %33, %cst_14 [1] : vector<8x8xf32> to vector<8xf32>
    %35 = vector.shape_cast %34 : vector<8xf32> to vector<8x1xf32>
    %36 = vector.broadcast %35 : vector<8x1xf32> to vector<8x8xf32>
    %37 = arith.subf %33, %36 : vector<8x8xf32>
    %38 = math.exp %37 : vector<8x8xf32>
    %cst_15 = arith.constant dense<0.000000e+00> : vector<8xf32>
    %39 = vector.multi_reduction <add>, %38, %cst_15 [1] : vector<8x8xf32> to vector<8xf32>
    %40 = vector.shape_cast %39 : vector<8xf32> to vector<8x1xf32>
    %41 = tpu.reciprocal %40 {approx = true} : vector<8x1xf32> -> vector<8x1xf32>
    %42 = vector.broadcast %41 : vector<8x1xf32> to vector<8x8xf32>
    %43 = arith.mulf %38, %42 : vector<8x8xf32>
    %cst_16 = arith.constant dense<0.000000e+00> : vector<8x8xf32>
    %44 = tpu.matmul %43, %32, %cst_16 {dimension_numbers = #tpu.dot_dimension_numbers<[1], [0], [0], [1], [0, 0, 1, 1], [], []>} : vector<8x8xf32>, vector<8x8xf32>, vector<8x8xf32> -> vector<8x8xf32>
    %c8 = arith.constant 8 : index
    %c0_17 = arith.constant 0 : index
    %45 = vector.load %arg5[%c8, %c0_17] : memref<32x32xf32, #tpu.memory_space<vmem>>, vector<8x32xf32>
    %cst_18 = arith.constant dense<0.000000e+00> : vector<8x32xf32>
    %46 = tpu.matmul %44, %45, %cst_18 {dimension_numbers = #tpu.dot_dimension_numbers<[1], [0], [0], [1], [0, 0, 1, 1], [], []>} : vector<8x8xf32>, vector<8x32xf32>, vector<8x32xf32> -> vector<8x32xf32>
    %47 = arith.addf %29, %46 : vector<8x32xf32>
    %48 = vector.extract_strided_slice %6 {offsets = [0, 16], sizes = [8, 8], strides = [1, 1]} : vector<8x32xf32> to vector<8x8xf32>
    %49 = vector.extract_strided_slice %7 {offsets = [0, 16], sizes = [8, 8], strides = [1, 1]} : vector<8x32xf32> to vector<8x8xf32>
    %50 = vector.extract_strided_slice %8 {offsets = [0, 16], sizes = [8, 8], strides = [1, 1]} : vector<8x32xf32> to vector<8x8xf32>
    %cst_19 = arith.constant dense<0.000000e+00> : vector<8x8xf32>
    %51 = tpu.matmul %48, %49, %cst_19 {dimension_numbers = #tpu.dot_dimension_numbers<[1], [1], [0], [0], [0, 0, 1, 0], [], []>} : vector<8x8xf32>, vector<8x8xf32>, vector<8x8xf32> -> vector<8x8xf32>
    %cst_20 = arith.constant dense<0xFF800000> : vector<8xf32>
    %52 = vector.multi_reduction <maximumf>, %51, %cst_20 [1] : vector<8x8xf32> to vector<8xf32>
    %53 = vector.shape_cast %52 : vector<8xf32> to vector<8x1xf32>
    %54 = vector.broadcast %53 : vector<8x1xf32> to vector<8x8xf32>
    %55 = arith.subf %51, %54 : vector<8x8xf32>
    %56 = math.exp %55 : vector<8x8xf32>
    %cst_21 = arith.constant dense<0.000000e+00> : vector<8xf32>
    %57 = vector.multi_reduction <add>, %56, %cst_21 [1] : vector<8x8xf32> to vector<8xf32>
    %58 = vector.shape_cast %57 : vector<8xf32> to vector<8x1xf32>
    %59 = tpu.reciprocal %58 {approx = true} : vector<8x1xf32> -> vector<8x1xf32>
    %60 = vector.broadcast %59 : vector<8x1xf32> to vector<8x8xf32>
    %61 = arith.mulf %56, %60 : vector<8x8xf32>
    %cst_22 = arith.constant dense<0.000000e+00> : vector<8x8xf32>
    %62 = tpu.matmul %61, %50, %cst_22 {dimension_numbers = #tpu.dot_dimension_numbers<[1], [0], [0], [1], [0, 0, 1, 1], [], []>} : vector<8x8xf32>, vector<8x8xf32>, vector<8x8xf32> -> vector<8x8xf32>
    %c16 = arith.constant 16 : index
    %c0_23 = arith.constant 0 : index
    %63 = vector.load %arg5[%c16, %c0_23] : memref<32x32xf32, #tpu.memory_space<vmem>>, vector<8x32xf32>
    %cst_24 = arith.constant dense<0.000000e+00> : vector<8x32xf32>
    %64 = tpu.matmul %62, %63, %cst_24 {dimension_numbers = #tpu.dot_dimension_numbers<[1], [0], [0], [1], [0, 0, 1, 1], [], []>} : vector<8x8xf32>, vector<8x32xf32>, vector<8x32xf32> -> vector<8x32xf32>
    %65 = arith.addf %47, %64 : vector<8x32xf32>
    %66 = vector.extract_strided_slice %6 {offsets = [0, 24], sizes = [8, 8], strides = [1, 1]} : vector<8x32xf32> to vector<8x8xf32>
    %67 = vector.extract_strided_slice %7 {offsets = [0, 24], sizes = [8, 8], strides = [1, 1]} : vector<8x32xf32> to vector<8x8xf32>
    %68 = vector.extract_strided_slice %8 {offsets = [0, 24], sizes = [8, 8], strides = [1, 1]} : vector<8x32xf32> to vector<8x8xf32>
    %cst_25 = arith.constant dense<0.000000e+00> : vector<8x8xf32>
    %69 = tpu.matmul %66, %67, %cst_25 {dimension_numbers = #tpu.dot_dimension_numbers<[1], [1], [0], [0], [0, 0, 1, 0], [], []>} : vector<8x8xf32>, vector<8x8xf32>, vector<8x8xf32> -> vector<8x8xf32>
    %cst_26 = arith.constant dense<0xFF800000> : vector<8xf32>
    %70 = vector.multi_reduction <maximumf>, %69, %cst_26 [1] : vector<8x8xf32> to vector<8xf32>
    %71 = vector.shape_cast %70 : vector<8xf32> to vector<8x1xf32>
    %72 = vector.broadcast %71 : vector<8x1xf32> to vector<8x8xf32>
    %73 = arith.subf %69, %72 : vector<8x8xf32>
    %74 = math.exp %73 : vector<8x8xf32>
    %cst_27 = arith.constant dense<0.000000e+00> : vector<8xf32>
    %75 = vector.multi_reduction <add>, %74, %cst_27 [1] : vector<8x8xf32> to vector<8xf32>
    %76 = vector.shape_cast %75 : vector<8xf32> to vector<8x1xf32>
    %77 = tpu.reciprocal %76 {approx = true} : vector<8x1xf32> -> vector<8x1xf32>
    %78 = vector.broadcast %77 : vector<8x1xf32> to vector<8x8xf32>
    %79 = arith.mulf %74, %78 : vector<8x8xf32>
    %cst_28 = arith.constant dense<0.000000e+00> : vector<8x8xf32>
    %80 = tpu.matmul %79, %68, %cst_28 {dimension_numbers = #tpu.dot_dimension_numbers<[1], [0], [0], [1], [0, 0, 1, 1], [], []>} : vector<8x8xf32>, vector<8x8xf32>, vector<8x8xf32> -> vector<8x8xf32>
    %c24 = arith.constant 24 : index
    %c0_29 = arith.constant 0 : index
    %81 = vector.load %arg5[%c24, %c0_29] : memref<32x32xf32, #tpu.memory_space<vmem>>, vector<8x32xf32>
    %cst_30 = arith.constant dense<0.000000e+00> : vector<8x32xf32>
    %82 = tpu.matmul %80, %81, %cst_30 {dimension_numbers = #tpu.dot_dimension_numbers<[1], [0], [0], [1], [0, 0, 1, 1], [], []>} : vector<8x8xf32>, vector<8x32xf32>, vector<8x32xf32> -> vector<8x32xf32>
    %83 = arith.addf %65, %82 : vector<8x32xf32>
    %c0_31 = arith.constant 0 : index
    %c0_32 = arith.constant 0 : index
    %c0_33 = arith.constant 0 : index
    %84 = vector.load %arg7[%c0_31, %c0_32, %c0_33] : memref<1x8x32xf32, #tpu.memory_space<vmem>>, vector<1x8x32xf32>
    %85 = vector.shape_cast %84 : vector<1x8x32xf32> to vector<8x32xf32>
    %86 = vector.shape_cast %83 : vector<8x32xf32> to vector<1x8x32xf32>
    tpu.vector_store %arg7[%c0_31, %c0_32, %c0_33], %86 {strides = array<i32>} : memref<1x8x32xf32, #tpu.memory_space<vmem>>, vector<1x8x32xf32>,
    return
  }
  func.func @transform_0(%arg0: i32, %arg1: i32) -> (i32, i32, i32) {
    %c0_i32 = arith.constant 0 : i32
    %c0_i32_0 = arith.constant 0 : i32
    %c0_i32_1 = arith.constant 0 : i32
    return %arg0, %c0_i32, %c0_i32_0 : i32, i32, i32
  }
  func.func @transform_1(%arg0: i32, %arg1: i32) -> (i32, i32) {
    %c0_i32 = arith.constant 0 : i32
    %c0_i32_0 = arith.constant 0 : i32
    %c0_i32_1 = arith.constant 0 : i32
    return %c0_i32, %c0_i32_0 : i32, i32
  }
  func.func @transform_2(%arg0: i32, %arg1: i32) -> (i32, i32) {
    %c0_i32 = arith.constant 0 : i32
    %c0_i32_0 = arith.constant 0 : i32
    %c0_i32_1 = arith.constant 0 : i32
    return %c0_i32, %c0_i32_0 : i32, i32
  }
  func.func @transform_3(%arg0: i32, %arg1: i32) -> (i32, i32) {
    %c0_i32 = arith.constant 0 : i32
    %c0_i32_0 = arith.constant 0 : i32
    %c0_i32_1 = arith.constant 0 : i32
    return %c0_i32, %c0_i32_0 : i32, i32
  }
  func.func @transform_4(%arg0: i32, %arg1: i32) -> (i32, i32) {
    %c0_i32 = arith.constant 0 : i32
    %c0_i32_0 = arith.constant 0 : i32
    %c0_i32_1 = arith.constant 0 : i32
    return %c0_i32, %c0_i32_0 : i32, i32
  }
  func.func @transform_5(%arg0: i32, %arg1: i32) -> (i32, i32, i32) {
    %c0_i32 = arith.constant 0 : i32
    %c0_i32_0 = arith.constant 0 : i32
    return %arg0, %arg1, %c0_i32 : i32, i32, i32
  }
}

</mosaic_0001>

<llo_original>
// kernel: tpu_custom_call.1
$region0: #{tpu_custom_call.1}
  #allocation0 [shape = 'u32[]', space=smem, size = 0x4, offset = 0x4, fixed_abs, tag = 'smem constant byte address 0x4 - core index']
  #allocation1 [shape = 'u32[72,128]{1,0:T(1,128)}', space=vmem, size = 0x9000, scoped, tag = 'internal scratch']
  #allocation2 [shape = 'f32[8,32]{1,0:T(8,128)}', space=vmem, size = 0x1000, scoped, tag = 'scratch operand']
  #allocation3 [shape = 'f32[8,32]{1,0:T(8,128)}', space=vmem, size = 0x1000, scoped, tag = 'scratch operand']
  #allocation4 [shape = 'f32[8,32]{1,0:T(8,128)}', space=vmem, size = 0x1000, scoped, tag = 'scratch operand']
  %s0 = inlined_call_operand.hbm [shape: f32[2,8,32], index: 0, kind: input, shape index: {}]
  %s1 = inlined_call_operand.hbm [shape: f32[32,96], index: 1, kind: input, shape index: {}]
  %s2 = inlined_call_operand.vmem [shape: f32[1,96], index: 2, kind: input, shape index: {}]
  %s3 = inlined_call_operand.hbm [shape: f32[32,32], index: 3, kind: input, shape index: {}]
  %s4 = inlined_call_operand.vmem [shape: f32[1,32], index: 4, kind: input, shape index: {}]
  %s5 = inlined_call_operand.hbm [shape: f32[2,8,32], index: 5, kind: output, shape index: {}]
  %s6 = sld [smem:[#allocation0]]
  $region69: #{tpu_custom_call.1} parent=0
    _
  %s8 = ssub.s32 1, %s6
  %s9 = scalar_select 0, %s8, %s6
  $region1: #{tpu_custom_call.1} parent=0
    #allocation5 [shape = 'u8[8192]{0}', space=vmem, size = 0x2000, scoped, tag = 'input window, operand 0']
    #allocation6 [shape = 's32[2]{0}', space=sflag, size = 0x8, scoped, tag = 'scoped memory for tpu_custom_call.1']
    #allocation7 [shape = 's32[2]{0}', space=sflag, size = 0x8, scoped, tag = 'scoped memory for tpu_custom_call.1']
    #allocation8 [shape = 'u8[16384]{0}', space=vmem, size = 0x4000, scoped, tag = 'input window, operand 1, single buffered']
    #allocation9 [shape = 's32[1]{0}', space=sflag, size = 0x4, scoped, tag = 'scoped memory for tpu_custom_call.1']
    #allocation10 [shape = 'u8[16384]{0}', space=vmem, size = 0x4000, scoped, tag = 'input window, operand 3, single buffered']
    #allocation11 [shape = 'u8[8192]{0}', space=vmem, size = 0x2000, scoped, tag = 'output window, operand 0']
    %10 = vsyncpa [#allocation6], 0
    %s11 = scalar_lea.sflag [#allocation6], 1
    %12 = vsyncpa %s11, 0
    %13 = vsyncpa [#allocation9], 0
    %14 = vsyncpa [#allocation7], 0
    %s15 = scalar_lea.sflag [#allocation7], 1
    %16 = vsyncpa %s15, 0
    loop: start=0, step=1, limit=4
    $region2: #{tpu_custom_call.1} parent=1 // loop_pre_header
      _
    $region3: #{tpu_custom_call.1} parent=1 // loop_header
      %s18 = sphi 0, %s22
      %p19 = scmp.ge.s32.totalorder %s18, 4
      %s25 = sphi 0, %s37
      %s26 = sphi 0, %s33
      %s27 = sphi 0, %s25
      %s28 = sphi 0, %s26
      %s29 = sphi 0, %s27
      %s30 = sphi 0, %s28
      %s40 = sphi 0, %s42
      %s43 = sphi 0, %s40
      %s44 = sphi 0, %s43
      %s60 = sphi 0, %s44
      %s64 = sphi 0, %s64
      %s66 = sphi 0, %s64
      %s67 = sphi 0, %s66
      %s81 = sphi 0, %s67
      %s85 = sphi 0, %s85
      %s87 = sphi 0, %s85
      %s88 = sphi 0, %s87
      %s102 = sphi 0, %s88
      %s106 = sphi 0, %s106
      %s108 = sphi 0, %s106
      %s109 = sphi 0, %s108
      %s123 = sphi 0, %s109
      %s127 = sphi 0, %s127
      %s129 = sphi 0, %s127
      %s130 = sphi 0, %s129
      %s144 = sphi 0, %s130
      %s152 = sphi 0, %s154
      %s155 = sphi 0, %s152
      %s156 = sphi 0, %s155
      %s172 = sphi 0, %s156
    $region4: #{tpu_custom_call.1} parent=1 // loop_header_branch
      %21 = sbr.rel (%p19) target = $region8
    $region5: #{tpu_custom_call.1} parent=1 // loop_body
      %s23 = ssub.s32 %s18, 1
      %s24 = ssub.s32 %s18, 2
      %s31 = sadd.s32 1, %s26
      %p32 = scmp.ge.s32.totalorder %s31, 1
      %s33 = scalar_select %p32, 0, %s31
      %s34 = sadd.s32 1, %s25
      %s35 = scalar_select %p32, %s34, %s25
      %p36 = scmp.ge.s32.totalorder %s35, 2
      %s37 = scalar_select %p36, 0, %s35
      %s38 = ssub.s32 %s25, %s37
      %p39 = scmp.eq.s32.totalorder %s38, 0
      %s41 = sadd.s32 %s40, 1
      %s42 = scalar_select %p39, %s40, %s41
      %p45 = pneg %p39
      %p46 = scmp.eq.s32.totalorder %s18, 1
      %p47 = por %p45, %p46
      %p48 = scmp.ne.s32.totalorder %s40, %s43
      %p49 = scmp.eq.s32.totalorder %s18, 0
      %p50 = por %p48, %p49
      %p51 = scmp.ne.s32.totalorder %s40, %s43
      %p52 = scmp.eq.s32.totalorder %s23, 1
      %p53 = por %p51, %p52
      %p54 = scmp.ne.s32.totalorder %s43, %s44
      %p55 = scmp.eq.s32.totalorder %s23, 0
      %p56 = por %p54, %p55
      %p57 = scmp.ne.s32.totalorder %s43, %s44
      %p58 = scmp.eq.s32.totalorder %s24, 1
      %p59 = por %p57, %p58
      %p61 = scmp.ne.s32.totalorder %s44, %s60
      %p62 = scmp.eq.s32.totalorder %s24, 0
      %p63 = por %p61, %p62
      %s65 = sadd.s32 %s64, 1
      %p68 = scmp.eq.s32.totalorder %s18, 1
      %p69 = scmp.ne.s32.totalorder %s64, %s66
      %p70 = scmp.eq.s32.totalorder %s18, 0
      %p71 = por %p69, %p70
      %p72 = scmp.ne.s32.totalorder %s64, %s66
      %p73 = scmp.eq.s32.totalorder %s23, 1
      %p74 = por %p72, %p73
      %p75 = scmp.ne.s32.totalorder %s66, %s67
      %p76 = scmp.eq.s32.totalorder %s23, 0
      %p77 = por %p75, %p76
      %p78 = scmp.ne.s32.totalorder %s66, %s67
      %p79 = scmp.eq.s32.totalorder %s24, 1
      %p80 = por %p78, %p79
      %p82 = scmp.ne.s32.totalorder %s67, %s81
      %p83 = scmp.eq.s32.totalorder %s24, 0
      %p84 = por %p82, %p83
      %s86 = sadd.s32 %s85, 1
      %p89 = scmp.eq.s32.totalorder %s18, 1
      %p90 = scmp.ne.s32.totalorder %s85, %s87
      %p91 = scmp.eq.s32.totalorder %s18, 0
      %p92 = por %p90, %p91
      %p93 = scmp.ne.s32.totalorder %s85, %s87
      %p94 = scmp.eq.s32.totalorder %s23, 1
      %p95 = por %p93, %p94
      %p96 = scmp.ne.s32.totalorder %s87, %s88
      %p97 = scmp.eq.s32.totalorder %s23, 0
      %p98 = por %p96, %p97
      %p99 = scmp.ne.s32.totalorder %s87, %s88
      %p100 = scmp.eq.s32.totalorder %s24, 1
      %p101 = por %p99, %p100
      %p103 = scmp.ne.s32.totalorder %s88, %s102
      %p104 = scmp.eq.s32.totalorder %s24, 0
      %p105 = por %p103, %p104
      %s107 = sadd.s32 %s106, 1
      %p110 = scmp.eq.s32.totalorder %s18, 1
      %p111 = scmp.ne.s32.totalorder %s106, %s108
      %p112 = scmp.eq.s32.totalorder %s18, 0
      %p113 = por %p111, %p112
      %p114 = scmp.ne.s32.totalorder %s106, %s108
      %p115 = scmp.eq.s32.totalorder %s23, 1
      %p116 = por %p114, %p115
      %p117 = scmp.ne.s32.totalorder %s108, %s109
      %p118 = scmp.eq.s32.totalorder %s23, 0
      %p119 = por %p117, %p118
      %p120 = scmp.ne.s32.totalorder %s108, %s109
      %p121 = scmp.eq.s32.totalorder %s24, 1
      %p122 = por %p120, %p121
      %p124 = scmp.ne.s32.totalorder %s109, %s123
      %p125 = scmp.eq.s32.totalorder %s24, 0
      %p126 = por %p124, %p125
      %s128 = sadd.s32 %s127, 1
      %p131 = scmp.eq.s32.totalorder %s18, 1
      %p132 = scmp.ne.s32.totalorder %s127, %s129
      %p133 = scmp.eq.s32.totalorder %s18, 0
      %p134 = por %p132, %p133
      %p135 = scmp.ne.s32.totalorder %s127, %s129
      %p136 = scmp.eq.s32.totalorder %s23, 1
      %p137 = por %p135, %p136
      %p138 = scmp.ne.s32.totalorder %s129, %s130
      %p139 = scmp.eq.s32.totalorder %s23, 0
      %p140 = por %p138, %p139
      %p141 = scmp.ne.s32.totalorder %s129, %s130
      %p142 = scmp.eq.s32.totalorder %s24, 1
      %p143 = por %p141, %p142
      %p145 = scmp.ne.s32.totalorder %s130, %s144
      %p146 = scmp.eq.s32.totalorder %s24, 0
      %p147 = por %p145, %p146
      %s148 = ssub.s32 %s25, %s37
      %s149 = ssub.s32 %s26, %s33
      %s150 = sor.u32 %s148, %s149
      %p151 = scmp.eq.s32.totalorder %s150, 0
      %s153 = sadd.s32 %s152, 1
      %s154 = scalar_select %p151, %s152, %s153
      %p157 = pneg %p151
      %p158 = scmp.eq.s32.totalorder %s18, 1
      %p159 = por %p157, %p158
      %p160 = scmp.ne.s32.totalorder %s152, %s155
      %p161 = scmp.eq.s32.totalorder %s18, 0
      %p162 = por %p160, %p161
      %p163 = scmp.ne.s32.totalorder %s152, %s155
      %p164 = scmp.eq.s32.totalorder %s23, 1
      %p165 = por %p163, %p164
      %p166 = scmp.ne.s32.totalorder %s155, %s156
      %p167 = scmp.eq.s32.totalorder %s23, 0
      %p168 = por %p166, %p167
      %p169 = scmp.ne.s32.totalorder %s155, %s156
      %p170 = scmp.eq.s32.totalorder %s24, 1
      %p171 = por %p169, %p170
      %p173 = scmp.ne.s32.totalorder %s156, %s172
      %p174 = scmp.eq.s32.totalorder %s24, 0
      %p175 = por %p173, %p174
      %p176 = scmp.le.s32.totalorder 1, %s18
      %p177 = scmp.lt.s32.totalorder %s18, 3
      %p178 = pnand %p176, %p177
      %p179 = pneg %p178
      // Predicated region
      $region9: #{tpu_custom_call.1} parent=5 // pred_check
        _
      $region10: #{tpu_custom_call.1} parent=5 // pred_check_branch
        %181 = sbr.rel (%p178) target = $region12
      $region11: #{tpu_custom_call.1} parent=5 // pred_region
        %s182 = ssub.s32 %s18, 1
        // Predicated region
        $region13: #{tpu_custom_call.1} parent=11 // pred_check
          %p183 = pneg %p77
        $region14: #{tpu_custom_call.1} parent=11 // pred_check_branch
          %185 = sbr.rel (%p183) target = $region16
        $region15: #{tpu_custom_call.1} parent=11 // pred_region
          %187 = vsyncadd [#allocation9], 0
          %s188 = sshll.u32 %s1, 4
          %s189 = int_to_ptr.hbm [resolvable:$true] %s188
          %s190 = sshll.u32 [#allocation8], 4
          %s191 = int_to_ptr.vmem [resolvable:$true] %s190
          %196 = dma.hbm_to_vmem [thread:$0]  %s189, 512, %s191, [#allocation9], 128, 128, 8
        $region16: #{tpu_custom_call.1} parent=11 // pred_fallthru
          _
        // Predicated region
        $region17: #{tpu_custom_call.1} parent=11 // pred_check
          %p197 = pneg %p98
        $region18: #{tpu_custom_call.1} parent=11 // pred_check_branch
          %199 = sbr.rel (%p197) target = $region20
        $region19: #{tpu_custom_call.1} parent=11 // pred_region
          _
        $region20: #{tpu_custom_call.1} parent=11 // pred_fallthru
          _
        // Predicated region
        $region21: #{tpu_custom_call.1} parent=11 // pred_check
          %p200 = pneg %p119
        $region22: #{tpu_custom_call.1} parent=11 // pred_check_branch
          %202 = sbr.rel (%p200) target = $region24
        $region23: #{tpu_custom_call.1} parent=11 // pred_region
          %204 = vsyncadd [#allocation9], 0
          %s205 = sshll.u32 %s3, 4
          %s206 = int_to_ptr.hbm [resolvable:$true] %s205
          %s207 = sshll.u32 [#allocation10], 4
          %s208 = int_to_ptr.vmem [resolvable:$true] %s207
          %213 = dma.hbm_to_vmem [thread:$0]  %s206, 512, %s208, [#allocation9], 128, 128, 8
        $region24: #{tpu_custom_call.1} parent=11 // pred_fallthru
          _
        // Predicated region
        $region25: #{tpu_custom_call.1} parent=11 // pred_check
          %p214 = pneg %p140
        $region26: #{tpu_custom_call.1} parent=11 // pred_check_branch
          %216 = sbr.rel (%p214) target = $region28
        $region27: #{tpu_custom_call.1} parent=11 // pred_region
          _
        $region28: #{tpu_custom_call.1} parent=11 // pred_fallthru
          _
      $region12: #{tpu_custom_call.1} parent=5 // pred_fallthru
        _
      %p217 = scmp.lt.s32.totalorder %s18, 2
      // Predicated region
      $region29: #{tpu_custom_call.1} parent=5 // pred_check
        %p218 = pneg %p217
      $region30: #{tpu_custom_call.1} parent=5 // pred_check_branch
        %220 = sbr.rel (%p218) target = $region32
      $region31: #{tpu_custom_call.1} parent=5 // pred_region
        // Predicated region
        $region33: #{tpu_custom_call.1} parent=31 // pred_check
          %p221 = pneg %p50
        $region34: #{tpu_custom_call.1} parent=31 // pred_check_branch
          %223 = sbr.rel (%p221) target = $region36
        $region35: #{tpu_custom_call.1} parent=31 // pred_region
          %s224 = sand.u32 %s40, 1
          %s225 = scalar_lea.sflag [#allocation6], %s224
          %s226 = sand.u32 %s40, 1
          %s227 = smul.addr %s226, 8
          %s228 = scalar_lea.vmem [#allocation5], %s227
          %230 = vsyncadd %s225, 0
          %s231 = smul.addr %s25, 8
          %s232 = scalar_lea.hbm %s0, %s231
          %s234 = sshll.u32 %s232, 4
          %s235 = int_to_ptr.hbm [resolvable:$true] %s234
          %s236 = sshll.u32 %s228, 4
          %s237 = int_to_ptr.vmem [resolvable:$true] %s236
          %239 = dma.hbm_to_vmem [thread:$0]  %s235, 128, %s237, %s225
        $region36: #{tpu_custom_call.1} parent=31 // pred_fallthru
          _
      $region32: #{tpu_custom_call.1} parent=5 // pred_fallthru
        _
      %p240 = scmp.le.s32.totalorder 1, %s18
      %p241 = scmp.lt.s32.totalorder %s18, 3
      %p242 = pnand %p240, %p241
      %p243 = pneg %p242
      // Predicated region
      $region37: #{tpu_custom_call.1} parent=5 // pred_check
        _
      $region38: #{tpu_custom_call.1} parent=5 // pred_check_branch
        %245 = sbr.rel (%p242) target = $region40
      $region39: #{tpu_custom_call.1} parent=5 // pred_region
        %s246 = ssub.s32 %s18, 1
        %s247 = sand.u32 %s43, 1
        %s248 = scalar_lea.sflag [#allocation6], %s247
        %s249 = sand.u32 %s43, 1
        %s250 = smul.addr %s249, 8
        %s251 = scalar_lea.vmem [#allocation5], %s250
        // Predicated region
        $region41: #{tpu_custom_call.1} parent=39 // pred_check
          %p252 = pneg %p56
        $region42: #{tpu_custom_call.1} parent=39 // pred_check_branch
          %254 = sbr.rel (%p252) target = $region44
        $region43: #{tpu_custom_call.1} parent=39 // pred_region
          %256 = dma.done %s248, 128
        $region44: #{tpu_custom_call.1} parent=39 // pred_fallthru
          _
        // Predicated region
        $region45: #{tpu_custom_call.1} parent=39 // pred_check
          %p257 = pneg %p77
        $region46: #{tpu_custom_call.1} parent=39 // pred_check_branch
          %259 = sbr.rel (%p257) target = $region48
        $region47: #{tpu_custom_call.1} parent=39 // pred_region
          %261 = dma.done [#allocation9], 512
        $region48: #{tpu_custom_call.1} parent=39 // pred_fallthru
          _
        // Predicated region
        $region49: #{tpu_custom_call.1} parent=39 // pred_check
          %p262 = pneg %p119
        $region50: #{tpu_custom_call.1} parent=39 // pred_check_branch
          %264 = sbr.rel (%p262) target = $region52
        $region51: #{tpu_custom_call.1} parent=39 // pred_region
          %266 = dma.done [#allocation9], 512
        $region52: #{tpu_custom_call.1} parent=39 // pred_fallthru
          _
        %s267 = sand.u32 %s43, 1
        %s268 = scalar_lea.sflag [#allocation6], %s267
        %s269 = sand.u32 %s43, 1
        %s270 = smul.addr %s269, 8
        %s271 = scalar_lea.vmem [#allocation5], %s270
        %p272 = pneg %p56
        %p273 = pneg %p53
        %p274 = pneg %p77
        %p275 = pneg %p74
        %p276 = pneg %p98
        %p277 = pneg %p95
        %p278 = pneg %p119
        %p279 = pneg %p116
        %p280 = pneg %p140
        %p281 = pneg %p137
        %p282 = pneg %p168
        %p283 = pneg %p165
        %s284 = sand.u32 %s155, 1
        %s285 = scalar_lea.sflag [#allocation7], %s284
        %s286 = sand.u32 %s155, 1
        %s287 = smul.addr %s286, 8
        %s288 = scalar_lea.vmem [#allocation11], %s287
        %p289 = scmp.eq.s32.totalorder %s28, 0
        // Predicated region
        $region53: #{tpu_custom_call.1} parent=39 // pred_check
          %p290 = pneg %p289
        $region54: #{tpu_custom_call.1} parent=39 // pred_check_branch
          %292 = sbr.rel (%p290) target = $region56
        $region55: #{tpu_custom_call.1} parent=39 // pred_region
          %v293 = vld [vmem:[%s251] sm:$0xff]
          %v294 = vld [vmem:[#allocation8] sm:$0xff]
          %v295 = vld [vmem:[#allocation8 + $0x8] sm:$0xff]
          %v296 = vld [vmem:[#allocation8 + $0x10] sm:$0xff]
          %v297 = vld [vmem:[#allocation8 + $0x18] sm:$0xff]
          %v298 = vld [vmem:[%s2] sm:$0x1]
          %v300 = vperm.slane %v298, 0
          %vm302 = vcmask 261120
          %v304 = vsel %vm302, %v293, 0
          %306 = vmatpush.msra.mxu0 0.0
          %307 = vmatpush.msra.mxu0 0.0
          %308 = vmatpush.msra.mxu0 0.0
          %309 = vmatpush.msra.mxu0 0.0
          %310 = vmatpush.msra.mxu0 0.0
          %311 = vmatpush.msra.mxu0 0.0
          %312 = vmatpush.msra.mxu0 0.0
          %313 = vmatpush.msra.mxu0 0.0
          %314 = vmatpush.msra.mxu0 0.0
          %315 = vmatpush.msra.mxu0 0.0
          %316 = vmatpush.msra.mxu0 0.0
          %317 = vmatpush.msra.mxu0 0.0
          %318 = vmatpush.msra.mxu0 %v297
          %319 = vmatpush.msra.mxu0 %v296
          %320 = vmatpush.msra.mxu0 %v295
          %321 = vmatpush.msra.mxu0 %v294
          %322 = vmatmul.f32.gmra.mxu0 %v304
          %v323 = vpop.f32.mrf.mxu0
          %v324 = vadd.f32 %v300, %v323
          %325 = vdwg.mxu0
          %326 = vst.msk [vmem:[#allocation2] sm:$0xff] %vm302, %v324
          %328 = vrot.lane.b32.xlu0 %v324, 96
          %v329 = vpop.permute.xlu0 %328
          %331 = vst.msk [vmem:[#allocation3] sm:$0xff] %vm302, %v329
          %v332 = vmul.f32 %v324, 0.35355338
          %334 = vrot.lane.b32.xlu0 %v332, 64
          %v335 = vpop.permute.xlu0 %334
          %337 = vst.msk [vmem:[#allocation4] sm:$0xff] %vm302, %v335
        $region56: #{tpu_custom_call.1} parent=39 // pred_fallthru
          _
        %s338 = smul.u32 %s28, 8
        %s339 = scalar_lea.vmem [#allocation2], %s338
        %v340 = vld [vmem:[%s339] sm:$0xff]
        %v341 = vld [vmem:[#allocation3] sm:$0xff]
        %v342 = vld [vmem:[#allocation4] sm:$0xff]
        %v343 = vld [vmem:[%s4] sm:$0x1]
        %v345 = vperm.slane %v343, 0
        %vm347 = vcmask 64512
        %v349 = vsel %vm347, %v340, 0
        %v352 = vsel %vm347, %v341, 0
        %354 = vmatpush.xpose.msra.mxu0 0.0
        %355 = vmatpush.xpose.msra.mxu0 0.0
        %356 = vmatpush.xpose.msra.mxu0 0.0
        %357 = vmatpush.xpose.msra.mxu0 0.0
        %358 = vmatpush.xpose.msra.mxu0 0.0
        %359 = vmatpush.xpose.msra.mxu0 0.0
        %360 = vmatpush.xpose.msra.mxu0 0.0
        %361 = vmatpush.xpose.msra.mxu0 0.0
        %362 = vmatpush.xpose.msra.mxu0 0.0
        %363 = vmatpush.xpose.msra.mxu0 0.0
        %364 = vmatpush.xpose.msra.mxu0 0.0
        %365 = vmatpush.xpose.msra.mxu0 0.0
        %366 = vmatpush.xpose.msra.mxu0 0.0
        %367 = vmatpush.xpose.msra.mxu0 0.0
        %368 = vmatpush.xpose.msra.mxu0 0.0
        %369 = vmatpush.xpose.msra.mxu0 %v352
        %370 = vmatmul.f32.gmra.mxu0 %v349
        %v371 = vpop.f32.mrf.mxu0
        %v372 = vadd.f32 0.0, %v371
        %373 = vdwg.mxu0
        %v374 = vsel %vm347, %v372, -inf
        %375 = vmax.xlane.f32.xlu0 %v374
        %v376 = vpop.xlane.xlu0 %375
        %v377 = vsub.f32 %v372, %v376
        %v378 = vmul.f32 %v377, 1.442695
        %v379 = vpow.pop %v378
        %v380 = vsel %vm347, %v379, 0.0
        %381 = vadd.xlane.f32.xlu0 %v380
        %v382 = vpop.xlane.xlu0 %381
        %v383 = vrcp.pop %v382
        %v384 = vmul.f32 %v379, %v383
        %v386 = vsel %vm347, %v384, 0
        %388 = vmatpush.msra.mxu0 0.0
        %389 = vmatpush.msra.mxu0 0.0
        %390 = vmatpush.msra.mxu0 0.0
        %391 = vmatpush.msra.mxu0 0.0
        %392 = vmatpush.msra.mxu0 0.0
        %393 = vmatpush.msra.mxu0 0.0
        %394 = vmatpush.msra.mxu0 0.0
        %395 = vmatpush.msra.mxu0 0.0
        %396 = vmatpush.msra.mxu0 0.0
        %397 = vmatpush.msra.mxu0 0.0
        %398 = vmatpush.msra.mxu0 0.0
        %399 = vmatpush.msra.mxu0 0.0
        %400 = vmatpush.msra.mxu0 0.0
        %401 = vmatpush.msra.mxu0 0.0
        %402 = vmatpush.msra.mxu0 0.0
        %403 = vmatpush.msra.mxu0 %v342
        %404 = vmatmul.f32.gmra.mxu0 %v386
        %v405 = vpop.f32.mrf.mxu0
        %v406 = vadd.f32 0.0, %v405
        %407 = vdwg.mxu0
        %v408 = vld [vmem:[#allocation10] sm:$0xff]
        %v410 = vsel %vm347, %v406, 0
        %412 = vmatpush.msra.mxu0 0.0
        %413 = vmatpush.msra.mxu0 0.0
        %414 = vmatpush.msra.mxu0 0.0
        %415 = vmatpush.msra.mxu0 0.0
        %416 = vmatpush.msra.mxu0 0.0
        %417 = vmatpush.msra.mxu0 0.0
        %418 = vmatpush.msra.mxu0 0.0
        %419 = vmatpush.msra.mxu0 0.0
        %420 = vmatpush.msra.mxu0 0.0
        %421 = vmatpush.msra.mxu0 0.0
        %422 = vmatpush.msra.mxu0 0.0
        %423 = vmatpush.msra.mxu0 0.0
        %424 = vmatpush.msra.mxu0 0.0
        %425 = vmatpush.msra.mxu0 0.0
        %426 = vmatpush.msra.mxu0 0.0
        %427 = vmatpush.msra.mxu0 %v408
        %428 = vmatmul.f32.gmra.mxu0 %v410
        %v429 = vpop.f32.mrf.mxu0
        %v430 = vadd.f32 0.0, %v429
        %431 = vdwg.mxu0
        %v432 = vadd.f32 %v345, %v430
        %433 = vrot.lane.b32.xlu0 %v340, 120
        %v434 = vpop.permute.xlu0 %433
        %435 = vrot.lane.b32.xlu0 %v341, 120
        %v436 = vpop.permute.xlu0 %435
        %v437 = vsel %vm347, %v434, 0
        %v439 = vsel %vm347, %v436, 0
        %441 = vmatpush.xpose.msra.mxu0 0.0
        %442 = vmatpush.xpose.msra.mxu0 0.0
        %443 = vmatpush.xpose.msra.mxu0 0.0
        %444 = vmatpush.xpose.msra.mxu0 0.0
        %445 = vmatpush.xpose.msra.mxu0 0.0
        %446 = vmatpush.xpose.msra.mxu0 0.0
        %447 = vmatpush.xpose.msra.mxu0 0.0
        %448 = vmatpush.xpose.msra.mxu0 0.0
        %449 = vmatpush.xpose.msra.mxu0 0.0
        %450 = vmatpush.xpose.msra.mxu0 0.0
        %451 = vmatpush.xpose.msra.mxu0 0.0
        %452 = vmatpush.xpose.msra.mxu0 0.0
        %453 = vmatpush.xpose.msra.mxu0 0.0
        %454 = vmatpush.xpose.msra.mxu0 0.0
        %455 = vmatpush.xpose.msra.mxu0 0.0
        %456 = vmatpush.xpose.msra.mxu0 %v439
        %457 = vmatmul.f32.gmra.mxu0 %v437
        %v458 = vpop.f32.mrf.mxu0
        %v459 = vadd.f32 0.0, %v458
        %460 = vdwg.mxu0
        %v461 = vsel %vm347, %v459, -inf
        %462 = vmax.xlane.f32.xlu0 %v461
        %v463 = vpop.xlane.xlu0 %462
        %v464 = vsub.f32 %v459, %v463
        %v465 = vmul.f32 %v464, 1.442695
        %v466 = vpow.pop %v465
        %v467 = vsel %vm347, %v466, 0.0
        %468 = vadd.xlane.f32.xlu0 %v467
        %v469 = vpop.xlane.xlu0 %468
        %v470 = vrcp.pop %v469
        %v471 = vmul.f32 %v466, %v470
        %473 = vrot.lane.b32.xlu0 %v342, 120
        %v474 = vpop.permute.xlu0 %473
        %v477 = vsel %vm347, %v471, 0
        %479 = vmatpush.msra.mxu0 0.0
        %480 = vmatpush.msra.mxu0 0.0
        %481 = vmatpush.msra.mxu0 0.0
        %482 = vmatpush.msra.mxu0 0.0
        %483 = vmatpush.msra.mxu0 0.0
        %484 = vmatpush.msra.mxu0 0.0
        %485 = vmatpush.msra.mxu0 0.0
        %486 = vmatpush.msra.mxu0 0.0
        %487 = vmatpush.msra.mxu0 0.0
        %488 = vmatpush.msra.mxu0 0.0
        %489 = vmatpush.msra.mxu0 0.0
        %490 = vmatpush.msra.mxu0 0.0
        %491 = vmatpush.msra.mxu0 0.0
        %492 = vmatpush.msra.mxu0 0.0
        %493 = vmatpush.msra.mxu0 0.0
        %494 = vmatpush.msra.mxu0 %v474
        %495 = vmatmul.f32.gmra.mxu0 %v477
        %v496 = vpop.f32.mrf.mxu0
        %v497 = vadd.f32 0.0, %v496
        %498 = vdwg.mxu0
        %v499 = vld [vmem:[#allocation10 + $0x8] sm:$0xff]
        %v501 = vsel %vm347, %v497, 0
        %503 = vmatpush.msra.mxu0 0.0
        %504 = vmatpush.msra.mxu0 0.0
        %505 = vmatpush.msra.mxu0 0.0
        %506 = vmatpush.msra.mxu0 0.0
        %507 = vmatpush.msra.mxu0 0.0
        %508 = vmatpush.msra.mxu0 0.0
        %509 = vmatpush.msra.mxu0 0.0
        %510 = vmatpush.msra.mxu0 0.0
        %511 = vmatpush.msra.mxu0 0.0
        %512 = vmatpush.msra.mxu0 0.0
        %513 = vmatpush.msra.mxu0 0.0
        %514 = vmatpush.msra.mxu0 0.0
        %515 = vmatpush.msra.mxu0 0.0
        %516 = vmatpush.msra.mxu0 0.0
        %517 = vmatpush.msra.mxu0 0.0
        %518 = vmatpush.msra.mxu0 %v499
        %519 = vmatmul.f32.gmra.mxu0 %v501
        %v520 = vpop.f32.mrf.mxu0
        %v521 = vadd.f32 0.0, %v520
        %522 = vdwg.mxu0
        %v523 = vadd.f32 %v432, %v521
        %524 = vrot.lane.b32.xlu0 %v340, 112
        %v525 = vpop.permute.xlu0 %524
        %526 = vrot.lane.b32.xlu0 %v341, 112
        %v527 = vpop.permute.xlu0 %526
        %v528 = vsel %vm347, %v525, 0
        %v530 = vsel %vm347, %v527, 0
        %532 = vmatpush.xpose.msra.mxu0 0.0
        %533 = vmatpush.xpose.msra.mxu0 0.0
        %534 = vmatpush.xpose.msra.mxu0 0.0
        %535 = vmatpush.xpose.msra.mxu0 0.0
        %536 = vmatpush.xpose.msra.mxu0 0.0
        %537 = vmatpush.xpose.msra.mxu0 0.0
        %538 = vmatpush.xpose.msra.mxu0 0.0
        %539 = vmatpush.xpose.msra.mxu0 0.0
        %540 = vmatpush.xpose.msra.mxu0 0.0
        %541 = vmatpush.xpose.msra.mxu0 0.0
        %542 = vmatpush.xpose.msra.mxu0 0.0
        %543 = vmatpush.xpose.msra.mxu0 0.0
        %544 = vmatpush.xpose.msra.mxu0 0.0
        %545 = vmatpush.xpose.msra.mxu0 0.0
        %546 = vmatpush.xpose.msra.mxu0 0.0
        %547 = vmatpush.xpose.msra.mxu0 %v530
        %548 = vmatmul.f32.gmra.mxu0 %v528
        %v549 = vpop.f32.mrf.mxu0
        %v550 = vadd.f32 0.0, %v549
        %551 = vdwg.mxu0
        %v552 = vsel %vm347, %v550, -inf
        %553 = vmax.xlane.f32.xlu0 %v552
        %v554 = vpop.xlane.xlu0 %553
        %v555 = vsub.f32 %v550, %v554
        %v556 = vmul.f32 %v555, 1.442695
        %v557 = vpow.pop %v556
        %v558 = vsel %vm347, %v557, 0.0
        %559 = vadd.xlane.f32.xlu0 %v558
        %v560 = vpop.xlane.xlu0 %559
        %v561 = vrcp.pop %v560
        %v562 = vmul.f32 %v557, %v561
        %563 = vrot.lane.b32.xlu0 %v342, 112
        %v564 = vpop.permute.xlu0 %563
        %v567 = vsel %vm347, %v562, 0
        %569 = vmatpush.msra.mxu0 0.0
        %570 = vmatpush.msra.mxu0 0.0
        %571 = vmatpush.msra.mxu0 0.0
        %572 = vmatpush.msra.mxu0 0.0
        %573 = vmatpush.msra.mxu0 0.0
        %574 = vmatpush.msra.mxu0 0.0
        %575 = vmatpush.msra.mxu0 0.0
        %576 = vmatpush.msra.mxu0 0.0
        %577 = vmatpush.msra.mxu0 0.0
        %578 = vmatpush.msra.mxu0 0.0
        %579 = vmatpush.msra.mxu0 0.0
        %580 = vmatpush.msra.mxu0 0.0
        %581 = vmatpush.msra.mxu0 0.0
        %582 = vmatpush.msra.mxu0 0.0
        %583 = vmatpush.msra.mxu0 0.0
        %584 = vmatpush.msra.mxu0 %v564
        %585 = vmatmul.f32.gmra.mxu0 %v567
        %v586 = vpop.f32.mrf.mxu0
        %v587 = vadd.f32 0.0, %v586
        %588 = vdwg.mxu0
        %v589 = vld [vmem:[#allocation10 + $0x10] sm:$0xff]
        %v591 = vsel %vm347, %v587, 0
        %593 = vmatpush.msra.mxu0 0.0
        %594 = vmatpush.msra.mxu0 0.0
        %595 = vmatpush.msra.mxu0 0.0
        %596 = vmatpush.msra.mxu0 0.0
        %597 = vmatpush.msra.mxu0 0.0
        %598 = vmatpush.msra.mxu0 0.0
        %599 = vmatpush.msra.mxu0 0.0
        %600 = vmatpush.msra.mxu0 0.0
        %601 = vmatpush.msra.mxu0 0.0
        %602 = vmatpush.msra.mxu0 0.0
        %603 = vmatpush.msra.mxu0 0.0
        %604 = vmatpush.msra.mxu0 0.0
        %605 = vmatpush.msra.mxu0 0.0
        %606 = vmatpush.msra.mxu0 0.0
        %607 = vmatpush.msra.mxu0 0.0
        %608 = vmatpush.msra.mxu0 %v589
        %609 = vmatmul.f32.gmra.mxu0 %v591
        %v610 = vpop.f32.mrf.mxu0
        %v611 = vadd.f32 0.0, %v610
        %612 = vdwg.mxu0
        %v613 = vadd.f32 %v523, %v611
        %614 = vrot.lane.b32.xlu0 %v340, 104
        %v615 = vpop.permute.xlu0 %614
        %616 = vrot.lane.b32.xlu0 %v341, 104
        %v617 = vpop.permute.xlu0 %616
        %v618 = vsel %vm347, %v615, 0
        %v620 = vsel %vm347, %v617, 0
        %622 = vmatpush.xpose.msra.mxu0 0.0
        %623 = vmatpush.xpose.msra.mxu0 0.0
        %624 = vmatpush.xpose.msra.mxu0 0.0
        %625 = vmatpush.xpose.msra.mxu0 0.0
        %626 = vmatpush.xpose.msra.mxu0 0.0
        %627 = vmatpush.xpose.msra.mxu0 0.0
        %628 = vmatpush.xpose.msra.mxu0 0.0
        %629 = vmatpush.xpose.msra.mxu0 0.0
        %630 = vmatpush.xpose.msra.mxu0 0.0
        %631 = vmatpush.xpose.msra.mxu0 0.0
        %632 = vmatpush.xpose.msra.mxu0 0.0
        %633 = vmatpush.xpose.msra.mxu0 0.0
        %634 = vmatpush.xpose.msra.mxu0 0.0
        %635 = vmatpush.xpose.msra.mxu0 0.0
        %636 = vmatpush.xpose.msra.mxu0 0.0
        %637 = vmatpush.xpose.msra.mxu0 %v620
        %638 = vmatmul.f32.gmra.mxu0 %v618
        %v639 = vpop.f32.mrf.mxu0
        %v640 = vadd.f32 0.0, %v639
        %641 = vdwg.mxu0
        %v642 = vsel %vm347, %v640, -inf
        %643 = vmax.xlane.f32.xlu0 %v642
        %v644 = vpop.xlane.xlu0 %643
        %v645 = vsub.f32 %v640, %v644
        %v646 = vmul.f32 %v645, 1.442695
        %v647 = vpow.pop %v646
        %v648 = vsel %vm347, %v647, 0.0
        %649 = vadd.xlane.f32.xlu0 %v648
        %v650 = vpop.xlane.xlu0 %649
        %v651 = vrcp.pop %v650
        %v652 = vmul.f32 %v647, %v651
        %653 = vrot.lane.b32.xlu0 %v342, 104
        %v654 = vpop.permute.xlu0 %653
        %v657 = vsel %vm347, %v652, 0
        %659 = vmatpush.msra.mxu0 0.0
        %660 = vmatpush.msra.mxu0 0.0
        %661 = vmatpush.msra.mxu0 0.0
        %662 = vmatpush.msra.mxu0 0.0
        %663 = vmatpush.msra.mxu0 0.0
        %664 = vmatpush.msra.mxu0 0.0
        %665 = vmatpush.msra.mxu0 0.0
        %666 = vmatpush.msra.mxu0 0.0
        %667 = vmatpush.msra.mxu0 0.0
        %668 = vmatpush.msra.mxu0 0.0
        %669 = vmatpush.msra.mxu0 0.0
        %670 = vmatpush.msra.mxu0 0.0
        %671 = vmatpush.msra.mxu0 0.0
        %672 = vmatpush.msra.mxu0 0.0
        %673 = vmatpush.msra.mxu0 0.0
        %674 = vmatpush.msra.mxu0 %v654
        %675 = vmatmul.f32.gmra.mxu0 %v657
        %v676 = vpop.f32.mrf.mxu0
        %v677 = vadd.f32 0.0, %v676
        %678 = vdwg.mxu0
        %v679 = vld [vmem:[#allocation10 + $0x18] sm:$0xff]
        %v681 = vsel %vm347, %v677, 0
        %683 = vmatpush.msra.mxu0 0.0
        %684 = vmatpush.msra.mxu0 0.0
        %685 = vmatpush.msra.mxu0 0.0
        %686 = vmatpush.msra.mxu0 0.0
        %687 = vmatpush.msra.mxu0 0.0
        %688 = vmatpush.msra.mxu0 0.0
        %689 = vmatpush.msra.mxu0 0.0
        %690 = vmatpush.msra.mxu0 0.0
        %691 = vmatpush.msra.mxu0 0.0
        %692 = vmatpush.msra.mxu0 0.0
        %693 = vmatpush.msra.mxu0 0.0
        %694 = vmatpush.msra.mxu0 0.0
        %695 = vmatpush.msra.mxu0 0.0
        %696 = vmatpush.msra.mxu0 0.0
        %697 = vmatpush.msra.mxu0 0.0
        %698 = vmatpush.msra.mxu0 %v679
        %699 = vmatmul.f32.gmra.mxu0 %v681
        %v700 = vpop.f32.mrf.mxu0
        %v701 = vadd.f32 0.0, %v700
        %702 = vdwg.mxu0
        %v703 = vadd.f32 %v613, %v701
        %vm704 = vcmask 261120
        %705 = vst.msk [vmem:[%s288] sm:$0xff] %vm704, %v703
        %s706 = sand.u32 %s155, 1
        %s707 = scalar_lea.sflag [#allocation7], %s706
        %s708 = sand.u32 %s155, 1
        %s709 = smul.addr %s708, 8
        %s710 = scalar_lea.vmem [#allocation11], %s709
        // Predicated region
        $region57: #{tpu_custom_call.1} parent=39 // pred_check
          %p711 = pneg %p165
        $region58: #{tpu_custom_call.1} parent=39 // pred_check_branch
          %713 = sbr.rel (%p711) target = $region60
        $region59: #{tpu_custom_call.1} parent=39 // pred_region
          %715 = vsyncadd %s707, 0
          %s716 = sadd.s32 %s28, %s27
          %s717 = smul.addr %s716, 8
          %s718 = scalar_lea.hbm %s5, %s717
          %s720 = sshll.u32 %s710, 4
          %s721 = int_to_ptr.vmem [resolvable:$true] %s720
          %s722 = sshll.u32 %s718, 4
          %s723 = int_to_ptr.hbm [resolvable:$true] %s722
          %725 = dma.vmem_to_hbm [thread:$0]  %s721, 128, %s723, %s707
        $region60: #{tpu_custom_call.1} parent=39 // pred_fallthru
          _
      $region40: #{tpu_custom_call.1} parent=5 // pred_fallthru
        _
      %p726 = scmp.le.s32.totalorder 2, %s18
      // Predicated region
      $region61: #{tpu_custom_call.1} parent=5 // pred_check
        %p727 = pneg %p726
      $region62: #{tpu_custom_call.1} parent=5 // pred_check_branch
        %729 = sbr.rel (%p727) target = $region64
      $region63: #{tpu_custom_call.1} parent=5 // pred_region
        %s730 = ssub.s32 %s18, 2
        // Predicated region
        $region65: #{tpu_custom_call.1} parent=63 // pred_check
          %p731 = pneg %p171
        $region66: #{tpu_custom_call.1} parent=63 // pred_check_branch
          %733 = sbr.rel (%p731) target = $region68
        $region67: #{tpu_custom_call.1} parent=63 // pred_region
          %s734 = sand.u32 %s156, 1
          %s735 = scalar_lea.sflag [#allocation7], %s734
          %s736 = sand.u32 %s156, 1
          %s737 = smul.addr %s736, 8
          %s738 = scalar_lea.vmem [#allocation11], %s737
          %740 = dma.done %s735, 128
        $region68: #{tpu_custom_call.1} parent=63 // pred_fallthru
          _
      $region64: #{tpu_custom_call.1} parent=5 // pred_fallthru
        _
    $region6: #{tpu_custom_call.1} parent=1 // loop_footer
      %s22 = sadd.s32 1, %s18
    $region7: #{tpu_custom_call.1} parent=1 // loop_footer_branch
      %17 = sbr.rel target = $region3
    $region8: #{tpu_custom_call.1} parent=1 // loop_exit
      _
    %741 = vsyncpa [#allocation6], 1
    %s742 = scalar_lea.sflag [#allocation6], 1
    %743 = vsyncpa %s742, 1
    %744 = vsyncpa [#allocation9], 1
    %745 = vsyncpa [#allocation7], 1
    %s746 = scalar_lea.sflag [#allocation7], 1
    %747 = vsyncpa %s746, 1

</llo_original>
